<compile_context>
chip_gen: v5e
topology: v5e:2x2
jax: 0.10.0
libtpu: 0.0.40
codegen_flags: <defaults>
</compile_context>

<pallas_src>
import functools

import jax
import jax.numpy as jnp
from jax.experimental import pallas as pl
from jax.experimental.pallas import tpu as pltpu

LEN_FEAT = 16
LATENT_DIM = 3
N_GMM = 2
_COS_EPS = 1e-8            # F.cosine_similarity eps
_DEFAULT_MAX_TILE = 8192   # lane-tile (batch) size; ~3 MiB VMEM footprint


def _round_up(n, m):
    return ((n + m - 1) // m) * m


def detector_kernel(x_ref,
                    ew1_ref, eb1_ref, ew2_ref, eb2_ref, ew3_ref, eb3_ref,
                    dw1_ref, db1_ref, dw2_ref, db2_ref, dw3_ref, db3_ref,
                    sw1_ref, sb1_ref, sw2_ref, sb2_ref,
                    dec_ref, z_ref, gamma_ref):
    # Batch-on-lanes: every activation below is (features, T); weights arrive
    # pre-transposed as (out, in), biases as (out, 1).
    x = x_ref[...]                                                           # (F, T)

    # ----- encoder: Linear(F,20) -> Tanh -> Linear(20,10) -> Tanh -> Linear(10,1)
    h = jnp.tanh(jnp.dot(ew1_ref[...], x, preferred_element_type=jnp.float32) + eb1_ref[...])   # (20, T)
    h = jnp.tanh(jnp.dot(ew2_ref[...], h, preferred_element_type=jnp.float32) + eb2_ref[...])   # (10, T)
    # M=1 output row: VPU multiply + XLU sublane-reduce instead of a degenerate MXU op.
    enc = jnp.sum(ew3_ref[...] * h, axis=0, keepdims=True) + eb3_ref[...]                       # (1, T)

    # ----- decoder: Linear(1,10) -> Tanh -> Linear(10,20) -> Tanh -> Linear(20,F)
    # K=1 matmul expressed as a broadcast outer product (same math, no MXU op).
    h = jnp.tanh(dw1_ref[...] * enc + db1_ref[...])                                             # (10, T)
    h = jnp.tanh(jnp.dot(dw2_ref[...], h, preferred_element_type=jnp.float32) + db2_ref[...])   # (20, T)
    dec = jnp.dot(dw3_ref[...], h, preferred_element_type=jnp.float32) + db3_ref[...]           # (F, T)
    dec_ref[...] = dec                                                      # lane-dense store

    # ----- reconstruction features (reductions over the feature/sublane axis)
    dotp = jnp.sum(x * dec, axis=0, keepdims=True)                          # (1, T)
    sq_x = jnp.sum(x * x, axis=0, keepdims=True)
    sq_d = jnp.sum(dec * dec, axis=0, keepdims=True)
    nx = jnp.sqrt(sq_x)
    nd = jnp.sqrt(sq_d)
    diff = x - dec
    # relative_euclidean_distance: ||x-dec|| / ||x||  (no eps, matches PyTorch)
    rec_eu = jnp.sqrt(jnp.sum(diff * diff, axis=0, keepdims=True)) * pl.reciprocal(nx)
    # cosine_similarity with per-norm eps clamp (max(nx,eps)*max(nd,eps))
    rec_cos = dotp * pl.reciprocal(jnp.maximum(nx, _COS_EPS) * jnp.maximum(nd, _COS_EPS))

    # z^T = [enc; rec_eu; rec_cos] (3, T), built in registers (sublane-index
    # select) and stored once — lane-dense.
    row = jax.lax.broadcasted_iota(jnp.int32, z_ref.shape, 0)
    z = jnp.where(row == 0, enc, jnp.where(row == 1, rec_eu, rec_cos))      # (3, T)
    z_ref[...] = z

    # ----- estimation: Linear(3,10) -> Tanh -> Dropout(0.5) -> Linear(10,2) -> Softmax(dim=1)
    # TODO(synk): Dropout is eval-mode identity (no in-kernel RNG mask).
    h = jnp.tanh(jnp.dot(sw1_ref[...], z, preferred_element_type=jnp.float32) + sb1_ref[...])   # (10, T)
    logits = jnp.dot(sw2_ref[...], h, preferred_element_type=jnp.float32) + sb2_ref[...]        # (2, T)
    m = jnp.max(logits, axis=0, keepdims=True)
    e = jnp.exp(logits - m)
    gamma_ref[...] = e * pl.reciprocal(jnp.sum(e, axis=0, keepdims=True))


def _prep_params(params):
    """Transpose weights to (out, in) and biases to (out, 1) for the
    batch-on-lanes kernel layout. ew3 stays (10, 1): it is consumed as a
    broadcast-multiply + sublane reduce."""
    (ew1, eb1, ew2, eb2, ew3, eb3,
     dw1, db1, dw2, db2, dw3, db3,
     sw1, sb1, sw2, sb2) = params
    t = lambda w: jnp.asarray(w, jnp.float32).T
    c = lambda b: jnp.asarray(b, jnp.float32).reshape(-1, 1)
    return (t(ew1), c(eb1), t(ew2), c(eb2), jnp.asarray(ew3, jnp.float32), c(eb3),
            t(dw1), c(db1), t(dw2), c(db2), t(dw3), c(db3),
            t(sw1), c(sb1), t(sw2), c(sb2))


@functools.partial(jax.jit, static_argnames=("max_tile",))
def detector_forward(x, params, *, max_tile=_DEFAULT_MAX_TILE):
    n, f = x.shape
    x = x.astype(jnp.float32)
    kparams = _prep_params(params)

    # Batch lives on the lane axis: pick a lane-tile (multiple of 128) so that
    # padding is <=127 rows per tile (no round_up(n, tile) blowup).
    num_tiles = max(1, -(-n // int(max_tile)))
    tile = _round_up(-(-n // num_tiles), 128)
    n_pad = num_tiles * tile

    x_t = x.T                                                   # (f, n), cheap XLA transpose
    if n_pad != n:
        x_t = jnp.pad(x_t, ((0, 0), (0, n_pad - n)))

    def batch_spec(rows):
        return pl.BlockSpec((rows, tile), lambda i: (0, i))

    def const_spec(arr):
        return pl.BlockSpec(arr.shape, lambda i: (0, 0))

    in_specs = [batch_spec(f)] + [const_spec(p) for p in kparams]
    out_shapes = (
        jax.ShapeDtypeStruct((f, n_pad), jnp.float32),            # dec^T
        jax.ShapeDtypeStruct((LATENT_DIM, n_pad), jnp.float32),   # z^T
        jax.ShapeDtypeStruct((N_GMM, n_pad), jnp.float32),        # gamma^T
    )
    out_specs = (batch_spec(f), batch_spec(LATENT_DIM), batch_spec(N_GMM))

    dec_t, z_t, gamma_t = pl.pallas_call(
        detector_kernel,
        grid=(num_tiles,),
        out_shape=out_shapes,
        in_specs=in_specs,
        out_specs=out_specs,
        compiler_params=pltpu.CompilerParams(
            dimension_semantics=("parallel",)),
    )(x_t, *kparams)

    # Wrapper-side relayout back to the PyTorch row-major convention.
    dec = dec_t[:, :n].T
    z = z_t[:, :n].T
    gamma = gamma_t[:, :n].T
    x3 = x             # fusion1_sign is None -> x3 = x.clone()
    enc = z[:, 0:1]    # enc is exactly the first column of z; no separate writeback
    # NOTE: padded (all-zero) columns produce Inf/NaN in rec_eu/rec_cos inside
    # the kernel (matching the reference's eps-free divide); they are computed
    # per-column and sliced off here, so valid rows are unaffected.
    # TODO(synk): fusion1/fusion2/if_mask branches are disabled by default and not implemented.
    return x3, enc, dec, z, gamma


def init_linear(key, fan_in, fan_out):
    # Deterministic stand-in for PyTorch's default Linear init: U(-1/sqrt(fan_in), +1/sqrt(fan_in)).
    kw, kb = jax.random.split(key)
    bound = float(fan_in) ** -0.5
    w = jax.random.uniform(kw, (fan_in, fan_out), jnp.float32, -bound, bound)
    b = jax.random.uniform(kb, (1, fan_out), jnp.float32, -bound, bound)
    return w, b


def init_params(key):
    ks = jax.random.split(key, 8)
    ew1, eb1 = init_linear(ks[0], LEN_FEAT, 20)
    ew2, eb2 = init_linear(ks[1], 20, 10)
    ew3, eb3 = init_linear(ks[2], 10, 1)
    dw1, db1 = init_linear(ks[3], 1, 10)
    dw2, db2 = init_linear(ks[4], 10, 20)
    dw3, db3 = init_linear(ks[5], 20, LEN_FEAT)
    sw1, sb1 = init_linear(ks[6], LATENT_DIM, 10)
    sw2, sb2 = init_linear(ks[7], 10, N_GMM)
    return (ew1, eb1, ew2, eb2, ew3, eb3,
            dw1, db1, dw2, db2, dw3, db3,
            sw1, sb1, sw2, sb2)


def reference_forward(x, params):
    (ew1, eb1, ew2, eb2, ew3, eb3,
     dw1, db1, dw2, db2, dw3, db3,
     sw1, sb1, sw2, sb2) = params
    x3 = x
    h = jnp.tanh(x @ ew1 + eb1)
    h = jnp.tanh(h @ ew2 + eb2)
    enc = h @ ew3 + eb3
    h = jnp.tanh(enc @ dw1 + db1)
    h = jnp.tanh(h @ dw2 + db2)
    dec = h @ dw3 + db3
    dotp = jnp.sum(x3 * dec, axis=1, keepdims=True)
    nx = jnp.sqrt(jnp.sum(x3 * x3, axis=1, keepdims=True))
    nd = jnp.sqrt(jnp.sum(dec * dec, axis=1, keepdims=True))
    rec_cos = dotp / (jnp.maximum(nx, _COS_EPS) * jnp.maximum(nd, _COS_EPS))
    rec_eu = jnp.sqrt(jnp.sum((x3 - dec) ** 2, axis=1, keepdims=True)) / nx
    z = jnp.concatenate([enc, rec_eu, rec_cos], axis=1)
    h = jnp.tanh(z @ sw1 + sb1)
    logits = h @ sw2 + sb2
    gamma = jax.nn.softmax(logits, axis=1)
    return x3, enc, dec, z, gamma


if __name__ == "__main__":
    key = jax.random.PRNGKey(0)
    kx, kx2, ky, kp = jax.random.split(key, 4)
    N = 8
    x = jax.random.normal(kx, (N, LEN_FEAT), jnp.float32)
    x2 = jax.random.normal(kx2, (N,), jnp.float32)   # unused: fusion1_sign defaults to None
    y = jax.random.normal(ky, (N,), jnp.float32)     # unused: fusion2_sign defaults to None
    params = init_params(kp)

    names = ("x3", "enc", "dec", "z", "gamma")

    # small batch (single lane-tile)
    outs = jax.block_until_ready(detector_forward(x, params))
    refs = reference_forward(x, params)
    for name, o, r in zip(names, outs, refs):
        assert o.shape == r.shape, (name, o.shape, r.shape)
        assert jnp.allclose(o, r, atol=1e-5, rtol=1e-5), name

    # larger batch, not a multiple of the tile: exercises the multi-tile grid,
    # lane padding and megacore-parallel path.
    N2 = 1000
    x_big = jax.random.normal(jax.random.PRNGKey(1), (N2, LEN_FEAT), jnp.float32)
    outs2 = jax.block_until_ready(detector_forward(x_big, params, max_tile=256))
    refs2 = reference_forward(x_big, params)
    for name, o, r in zip(names, outs2, refs2):
        assert o.shape == r.shape, (name, o.shape, r.shape)
        assert jnp.allclose(o, r, atol=1e-5, rtol=1e-5), name

    print("KERNEL_OK")
</pallas_src>

<mosaic_0001>
module attributes {stable_mosaic.version = 11 : i64} {
  func.func @detector_kernel(%arg0: i32, %arg1: memref<16x128xf32, #tpu.memory_space<vmem>>, %arg2: memref<20x16xf32, #tpu.memory_space<vmem>>, %arg3: memref<20x1xf32, #tpu.memory_space<vmem>>, %arg4: memref<10x20xf32, #tpu.memory_space<vmem>>, %arg5: memref<10x1xf32, #tpu.memory_space<vmem>>, %arg6: memref<10x1xf32, #tpu.memory_space<vmem>>, %arg7: memref<1x1xf32, #tpu.memory_space<vmem>>, %arg8: memref<10x1xf32, #tpu.memory_space<vmem>>, %arg9: memref<10x1xf32, #tpu.memory_space<vmem>>, %arg10: memref<20x10xf32, #tpu.memory_space<vmem>>, %arg11: memref<20x1xf32, #tpu.memory_space<vmem>>, %arg12: memref<16x20xf32, #tpu.memory_space<vmem>>, %arg13: memref<16x1xf32, #tpu.memory_space<vmem>>, %arg14: memref<10x3xf32, #tpu.memory_space<vmem>>, %arg15: memref<10x1xf32, #tpu.memory_space<vmem>>, %arg16: memref<2x10xf32, #tpu.memory_space<vmem>>, %arg17: memref<2x1xf32, #tpu.memory_space<vmem>>, %arg18: memref<16x128xf32, #tpu.memory_space<vmem>>, %arg19: memref<3x128xf32, #tpu.memory_space<vmem>>, %arg20: memref<2x128xf32, #tpu.memory_space<vmem>>) attributes {dimension_semantics = [#tpu.dimension_semantics<parallel>], iteration_bounds = array<i64: 1>, scalar_prefetch = 0 : i64, scratch_operands = 0 : i64, tpu.core_type = #tpu.core_type<tc>, window_params = [{transform_indices = @transform_0, window_bounds = array<i64: 16, 128>}, {pipeline_mode = #tpu.pipeline_mode<synchronous>, transform_indices = @transform_1, window_bounds = array<i64: 20, 16>}, {pipeline_mode = #tpu.pipeline_mode<synchronous>, transform_indices = @transform_2, window_bounds = array<i64: 20, 1>}, {pipeline_mode = #tpu.pipeline_mode<synchronous>, transform_indices = @transform_3, window_bounds = array<i64: 10, 20>}, {pipeline_mode = #tpu.pipeline_mode<synchronous>, transform_indices = @transform_4, window_bounds = array<i64: 10, 1>}, {pipeline_mode = #tpu.pipeline_mode<synchronous>, transform_indices = @transform_5, window_bounds = array<i64: 10, 1>}, {pipeline_mode = #tpu.pipeline_mode<synchronous>, transform_indices = @transform_6, window_bounds = array<i64: 1, 1>}, {pipeline_mode = #tpu.pipeline_mode<synchronous>, transform_indices = @transform_7, window_bounds = array<i64: 10, 1>}, {pipeline_mode = #tpu.pipeline_mode<synchronous>, transform_indices = @transform_8, window_bounds = array<i64: 10, 1>}, {pipeline_mode = #tpu.pipeline_mode<synchronous>, transform_indices = @transform_9, window_bounds = array<i64: 20, 10>}, {pipeline_mode = #tpu.pipeline_mode<synchronous>, transform_indices = @transform_10, window_bounds = array<i64: 20, 1>}, {pipeline_mode = #tpu.pipeline_mode<synchronous>, transform_indices = @transform_11, window_bounds = array<i64: 16, 20>}, {pipeline_mode = #tpu.pipeline_mode<synchronous>, transform_indices = @transform_12, window_bounds = array<i64: 16, 1>}, {pipeline_mode = #tpu.pipeline_mode<synchronous>, transform_indices = @transform_13, window_bounds = array<i64: 10, 3>}, {pipeline_mode = #tpu.pipeline_mode<synchronous>, transform_indices = @transform_14, window_bounds = array<i64: 10, 1>}, {pipeline_mode = #tpu.pipeline_mode<synchronous>, transform_indices = @transform_15, window_bounds = array<i64: 2, 10>}, {pipeline_mode = #tpu.pipeline_mode<synchronous>, transform_indices = @transform_16, window_bounds = array<i64: 2, 1>}, {transform_indices = @transform_17, window_bounds = array<i64: 16, 128>}, {transform_indices = @transform_18, window_bounds = array<i64: 3, 128>}, {transform_indices = @transform_19, window_bounds = array<i64: 2, 128>}]} {
    %c0 = arith.constant 0 : index
    %c0_0 = arith.constant 0 : index
    %0 = vector.load %arg1[%c0, %c0_0] : memref<16x128xf32, #tpu.memory_space<vmem>>, vector<16x128xf32>
    %c0_1 = arith.constant 0 : index
    %c0_2 = arith.constant 0 : index
    %1 = vector.load %arg2[%c0_1, %c0_2] : memref<20x16xf32, #tpu.memory_space<vmem>>, vector<20x16xf32>
    %cst = arith.constant dense<0.000000e+00> : vector<20x128xf32>
    %2 = tpu.matmul %1, %0, %cst {dimension_numbers = #tpu.dot_dimension_numbers<[1], [0], [0], [1], [0, 0, 1, 1], [], []>} : vector<20x16xf32>, vector<16x128xf32>, vector<20x128xf32> -> vector<20x128xf32>
    %c0_3 = arith.constant 0 : index
    %c0_4 = arith.constant 0 : index
    %3 = vector.load %arg3[%c0_3, %c0_4] : memref<20x1xf32, #tpu.memory_space<vmem>>, vector<20x1xf32>
    %4 = vector.broadcast %3 : vector<20x1xf32> to vector<20x128xf32>
    %5 = arith.addf %2, %4 : vector<20x128xf32>
    %6 = math.tanh %5 : vector<20x128xf32>
    %c0_5 = arith.constant 0 : index
    %c0_6 = arith.constant 0 : index
    %7 = vector.load %arg4[%c0_5, %c0_6] : memref<10x20xf32, #tpu.memory_space<vmem>>, vector<10x20xf32>
    %cst_7 = arith.constant dense<0.000000e+00> : vector<10x128xf32>
    %8 = tpu.matmul %7, %6, %cst_7 {dimension_numbers = #tpu.dot_dimension_numbers<[1], [0], [0], [1], [0, 0, 1, 1], [], []>} : vector<10x20xf32>, vector<20x128xf32>, vector<10x128xf32> -> vector<10x128xf32>
    %c0_8 = arith.constant 0 : index
    %c0_9 = arith.constant 0 : index
    %9 = vector.load %arg5[%c0_8, %c0_9] : memref<10x1xf32, #tpu.memory_space<vmem>>, vector<10x1xf32>
    %10 = vector.broadcast %9 : vector<10x1xf32> to vector<10x128xf32>
    %11 = arith.addf %8, %10 : vector<10x128xf32>
    %12 = math.tanh %11 : vector<10x128xf32>
    %c0_10 = arith.constant 0 : index
    %c0_11 = arith.constant 0 : index
    %13 = vector.load %arg6[%c0_10, %c0_11] : memref<10x1xf32, #tpu.memory_space<vmem>>, vector<10x1xf32>
    %14 = vector.broadcast %13 : vector<10x1xf32> to vector<10x128xf32>
    %15 = arith.mulf %14, %12 : vector<10x128xf32>
    %cst_12 = arith.constant dense<0.000000e+00> : vector<128xf32>
    %16 = vector.multi_reduction <add>, %15, %cst_12 [0] : vector<10x128xf32> to vector<128xf32>
    %17 = vector.shape_cast %16 : vector<128xf32> to vector<1x128xf32>
    %c0_13 = arith.constant 0 : index
    %c0_14 = arith.constant 0 : index
    %18 = vector.load %arg7[%c0_13, %c0_14] : memref<1x1xf32, #tpu.memory_space<vmem>>, vector<1x1xf32>
    %19 = vector.broadcast %18 : vector<1x1xf32> to vector<1x128xf32>
    %20 = arith.addf %17, %19 : vector<1x128xf32>
    %c0_15 = arith.constant 0 : index
    %c0_16 = arith.constant 0 : index
    %21 = vector.load %arg8[%c0_15, %c0_16] : memref<10x1xf32, #tpu.memory_space<vmem>>, vector<10x1xf32>
    %22 = vector.broadcast %21 : vector<10x1xf32> to vector<10x128xf32>
    %23 = vector.broadcast %20 : vector<1x128xf32> to vector<10x128xf32>
    %24 = arith.mulf %22, %23 : vector<10x128xf32>
    %c0_17 = arith.constant 0 : index
    %c0_18 = arith.constant 0 : index
    %25 = vector.load %arg9[%c0_17, %c0_18] : memref<10x1xf32, #tpu.memory_space<vmem>>, vector<10x1xf32>
    %26 = vector.broadcast %25 : vector<10x1xf32> to vector<10x128xf32>
    %27 = arith.addf %24, %26 : vector<10x128xf32>
    %28 = math.tanh %27 : vector<10x128xf32>
    %c0_19 = arith.constant 0 : index
    %c0_20 = arith.constant 0 : index
    %29 = vector.load %arg10[%c0_19, %c0_20] : memref<20x10xf32, #tpu.memory_space<vmem>>, vector<20x10xf32>
    %cst_21 = arith.constant dense<0.000000e+00> : vector<20x128xf32>
    %30 = tpu.matmul %29, %28, %cst_21 {dimension_numbers = #tpu.dot_dimension_numbers<[1], [0], [0], [1], [0, 0, 1, 1], [], []>} : vector<20x10xf32>, vector<10x128xf32>, vector<20x128xf32> -> vector<20x128xf32>
    %c0_22 = arith.constant 0 : index
    %c0_23 = arith.constant 0 : index
    %31 = vector.load %arg11[%c0_22, %c0_23] : memref<20x1xf32, #tpu.memory_space<vmem>>, vector<20x1xf32>
    %32 = vector.broadcast %31 : vector<20x1xf32> to vector<20x128xf32>
    %33 = arith.addf %30, %32 : vector<20x128xf32>
    %34 = math.tanh %33 : vector<20x128xf32>
    %c0_24 = arith.constant 0 : index
    %c0_25 = arith.constant 0 : index
    %35 = vector.load %arg12[%c0_24, %c0_25] : memref<16x20xf32, #tpu.memory_space<vmem>>, vector<16x20xf32>
    %cst_26 = arith.constant dense<0.000000e+00> : vector<16x128xf32>
    %36 = tpu.matmul %35, %34, %cst_26 {dimension_numbers = #tpu.dot_dimension_numbers<[1], [0], [0], [1], [0, 0, 1, 1], [], []>} : vector<16x20xf32>, vector<20x128xf32>, vector<16x128xf32> -> vector<16x128xf32>
    %c0_27 = arith.constant 0 : index
    %c0_28 = arith.constant 0 : index
    %37 = vector.load %arg13[%c0_27, %c0_28] : memref<16x1xf32, #tpu.memory_space<vmem>>, vector<16x1xf32>
    %38 = vector.broadcast %37 : vector<16x1xf32> to vector<16x128xf32>
    %39 = arith.addf %36, %38 : vector<16x128xf32>
    %c0_29 = arith.constant 0 : index
    %c0_30 = arith.constant 0 : index
    %40 = vector.load %arg18[%c0_29, %c0_30] : memref<16x128xf32, #tpu.memory_space<vmem>>, vector<16x128xf32>
    tpu.vector_store %arg18[%c0_29, %c0_30], %39 {strides = array<i32>} : memref<16x128xf32, #tpu.memory_space<vmem>>, vector<16x128xf32>,
    %41 = arith.mulf %0, %39 : vector<16x128xf32>
    %cst_31 = arith.constant dense<0.000000e+00> : vector<128xf32>
    %42 = vector.multi_reduction <add>, %41, %cst_31 [0] : vector<16x128xf32> to vector<128xf32>
    %43 = vector.shape_cast %42 : vector<128xf32> to vector<1x128xf32>
    %44 = arith.mulf %0, %0 : vector<16x128xf32>
    %cst_32 = arith.constant dense<0.000000e+00> : vector<128xf32>
    %45 = vector.multi_reduction <add>, %44, %cst_32 [0] : vector<16x128xf32> to vector<128xf32>
    %46 = vector.shape_cast %45 : vector<128xf32> to vector<1x128xf32>
    %47 = arith.mulf %39, %39 : vector<16x128xf32>
    %cst_33 = arith.constant dense<0.000000e+00> : vector<128xf32>
    %48 = vector.multi_reduction <add>, %47, %cst_33 [0] : vector<16x128xf32> to vector<128xf32>
    %49 = vector.shape_cast %48 : vector<128xf32> to vector<1x128xf32>
    %50 = math.sqrt %46 : vector<1x128xf32>
    %51 = math.sqrt %49 : vector<1x128xf32>
    %52 = arith.subf %0, %39 : vector<16x128xf32>
    %53 = arith.mulf %52, %52 : vector<16x128xf32>
    %cst_34 = arith.constant dense<0.000000e+00> : vector<128xf32>
    %54 = vector.multi_reduction <add>, %53, %cst_34 [0] : vector<16x128xf32> to vector<128xf32>
    %55 = vector.shape_cast %54 : vector<128xf32> to vector<1x128xf32>
    %56 = math.sqrt %55 : vector<1x128xf32>
    %57 = tpu.reciprocal %50 : vector<1x128xf32> -> vector<1x128xf32>
    %58 = arith.mulf %56, %57 : vector<1x128xf32>
    %cst_35 = arith.constant 9.99999993E-9 : f32
    %59 = vector.broadcast %cst_35 : f32 to vector<1x128xf32>
    %60 = arith.maximumf %50, %59 : vector<1x128xf32>
    %cst_36 = arith.constant 9.99999993E-9 : f32
    %61 = vector.broadcast %cst_36 : f32 to vector<1x128xf32>
    %62 = arith.maximumf %51, %61 : vector<1x128xf32>
    %63 = arith.mulf %60, %62 : vector<1x128xf32>
    %64 = tpu.reciprocal %63 : vector<1x128xf32> -> vector<1x128xf32>
    %65 = arith.mulf %43, %64 : vector<1x128xf32>
    %66 = tpu.iota {dimensions = array<i32: 0>} : vector<3x128xi32>
    %c0_i32 = arith.constant 0 : i32
    %67 = vector.broadcast %c0_i32 : i32 to vector<3x128xi32>
    %68 = arith.cmpi eq, %66, %67 : vector<3x128xi32>
    %c1_i32 = arith.constant 1 : i32
    %69 = vector.broadcast %c1_i32 : i32 to vector<3x128xi32>
    %70 = arith.cmpi eq, %66, %69 : vector<3x128xi32>
    %71 = vector.shape_cast %58 : vector<1x128xf32> to vector<1x128xf32>
    %72 = vector.broadcast %71 : vector<1x128xf32> to vector<3x128xf32>
    %73 = vector.shape_cast %65 : vector<1x128xf32> to vector<1x128xf32>
    %74 = vector.broadcast %73 : vector<1x128xf32> to vector<3x128xf32>
    %75 = arith.select %70, %72, %74 : vector<3x128xi1>, vector<3x128xf32>
    %76 = vector.shape_cast %20 : vector<1x128xf32> to vector<1x128xf32>
    %77 = vector.broadcast %76 : vector<1x128xf32> to vector<3x128xf32>
    %78 = arith.select %68, %77, %75 : vector<3x128xi1>, vector<3x128xf32>
    %c0_37 = arith.constant 0 : index
    %c0_38 = arith.constant 0 : index
    %79 = vector.load %arg19[%c0_37, %c0_38] : memref<3x128xf32, #tpu.memory_space<vmem>>, vector<3x128xf32>
    tpu.vector_store %arg19[%c0_37, %c0_38], %78 {strides = array<i32>} : memref<3x128xf32, #tpu.memory_space<vmem>>, vector<3x128xf32>,
    %c0_39 = arith.constant 0 : index
    %c0_40 = arith.constant 0 : index
    %80 = vector.load %arg14[%c0_39, %c0_40] : memref<10x3xf32, #tpu.memory_space<vmem>>, vector<10x3xf32>
    %cst_41 = arith.constant dense<0.000000e+00> : vector<10x128xf32>
    %81 = tpu.matmul %80, %78, %cst_41 {dimension_numbers = #tpu.dot_dimension_numbers<[1], [0], [0], [1], [0, 0, 1, 1], [], []>} : vector<10x3xf32>, vector<3x128xf32>, vector<10x128xf32> -> vector<10x128xf32>
    %c0_42 = arith.constant 0 : index
    %c0_43 = arith.constant 0 : index
    %82 = vector.load %arg15[%c0_42, %c0_43] : memref<10x1xf32, #tpu.memory_space<vmem>>, vector<10x1xf32>
    %83 = vector.broadcast %82 : vector<10x1xf32> to vector<10x128xf32>
    %84 = arith.addf %81, %83 : vector<10x128xf32>
    %85 = math.tanh %84 : vector<10x128xf32>
    %c0_44 = arith.constant 0 : index
    %c0_45 = arith.constant 0 : index
    %86 = vector.load %arg16[%c0_44, %c0_45] : memref<2x10xf32, #tpu.memory_space<vmem>>, vector<2x10xf32>
    %cst_46 = arith.constant dense<0.000000e+00> : vector<2x128xf32>
    %87 = tpu.matmul %86, %85, %cst_46 {dimension_numbers = #tpu.dot_dimension_numbers<[1], [0], [0], [1], [0, 0, 1, 1], [], []>} : vector<2x10xf32>, vector<10x128xf32>, vector<2x128xf32> -> vector<2x128xf32>
    %c0_47 = arith.constant 0 : index
    %c0_48 = arith.constant 0 : index
    %88 = vector.load %arg17[%c0_47, %c0_48] : memref<2x1xf32, #tpu.memory_space<vmem>>, vector<2x1xf32>
    %89 = vector.broadcast %88 : vector<2x1xf32> to vector<2x128xf32>
    %90 = arith.addf %87, %89 : vector<2x128xf32>
    %cst_49 = arith.constant dense<0xFF800000> : vector<128xf32>
    %91 = vector.multi_reduction <maximumf>, %90, %cst_49 [0] : vector<2x128xf32> to vector<128xf32>
    %92 = vector.shape_cast %91 : vector<128xf32> to vector<1x128xf32>
    %93 = vector.broadcast %92 : vector<1x128xf32> to vector<2x128xf32>
    %94 = arith.subf %90, %93 : vector<2x128xf32>
    %95 = math.exp %94 : vector<2x128xf32>
    %cst_50 = arith.constant dense<0.000000e+00> : vector<128xf32>
    %96 = vector.multi_reduction <add>, %95, %cst_50 [0] : vector<2x128xf32> to vector<128xf32>
    %97 = vector.shape_cast %96 : vector<128xf32> to vector<1x128xf32>
    %98 = tpu.reciprocal %97 : vector<1x128xf32> -> vector<1x128xf32>
    %99 = vector.broadcast %98 : vector<1x128xf32> to vector<2x128xf32>
    %100 = arith.mulf %95, %99 : vector<2x128xf32>
    %c0_51 = arith.constant 0 : index
    %c0_52 = arith.constant 0 : index
    %101 = vector.load %arg20[%c0_51, %c0_52] : memref<2x128xf32, #tpu.memory_space<vmem>>, vector<2x128xf32>
    tpu.vector_store %arg20[%c0_51, %c0_52], %100 {strides = array<i32>} : memref<2x128xf32, #tpu.memory_space<vmem>>, vector<2x128xf32>,
    return
  }
  func.func @transform_0(%arg0: i32) -> (i32, i32) {
    %c0_i32 = arith.constant 0 : i32
    %c0_i32_0 = arith.constant 0 : i32
    return %c0_i32, %arg0 : i32, i32
  }
  func.func @transform_1(%arg0: i32) -> (i32, i32) {
    %c0_i32 = arith.constant 0 : i32
    %c0_i32_0 = arith.constant 0 : i32
    %c0_i32_1 = arith.constant 0 : i32
    return %c0_i32, %c0_i32_0 : i32, i32
  }
  func.func @transform_2(%arg0: i32) -> (i32, i32) {
    %c0_i32 = arith.constant 0 : i32
    %c0_i32_0 = arith.constant 0 : i32
    %c0_i32_1 = arith.constant 0 : i32
    return %c0_i32, %c0_i32_0 : i32, i32
  }
  func.func @transform_3(%arg0: i32) -> (i32, i32) {
    %c0_i32 = arith.constant 0 : i32
    %c0_i32_0 = arith.constant 0 : i32
    %c0_i32_1 = arith.constant 0 : i32
    return %c0_i32, %c0_i32_0 : i32, i32
  }
  func.func @transform_4(%arg0: i32) -> (i32, i32) {
    %c0_i32 = arith.constant 0 : i32
    %c0_i32_0 = arith.constant 0 : i32
    %c0_i32_1 = arith.constant 0 : i32
    return %c0_i32, %c0_i32_0 : i32, i32
  }
  func.func @transform_5(%arg0: i32) -> (i32, i32) {
    %c0_i32 = arith.constant 0 : i32
    %c0_i32_0 = arith.constant 0 : i32
    %c0_i32_1 = arith.constant 0 : i32
    return %c0_i32, %c0_i32_0 : i32, i32
  }
  func.func @transform_6(%arg0: i32) -> (i32, i32) {
    %c0_i32 = arith.constant 0 : i32
    %c0_i32_0 = arith.constant 0 : i32
    %c0_i32_1 = arith.constant 0 : i32
    return %c0_i32, %c0_i32_0 : i32, i32
  }
  func.func @transform_7(%arg0: i32) -> (i32, i32) {
    %c0_i32 = arith.constant 0 : i32
    %c0_i32_0 = arith.constant 0 : i32
    %c0_i32_1 = arith.constant 0 : i32
    return %c0_i32, %c0_i32_0 : i32, i32
  }
  func.func @transform_8(%arg0: i32) -> (i32, i32) {
    %c0_i32 = arith.constant 0 : i32
    %c0_i32_0 = arith.constant 0 : i32
    %c0_i32_1 = arith.constant 0 : i32
    return %c0_i32, %c0_i32_0 : i32, i32
  }
  func.func @transform_9(%arg0: i32) -> (i32, i32) {
    %c0_i32 = arith.constant 0 : i32
    %c0_i32_0 = arith.constant 0 : i32
    %c0_i32_1 = arith.constant 0 : i32
    return %c0_i32, %c0_i32_0 : i32, i32
  }
  func.func @transform_10(%arg0: i32) -> (i32, i32) {
    %c0_i32 = arith.constant 0 : i32
    %c0_i32_0 = arith.constant 0 : i32
    %c0_i32_1 = arith.constant 0 : i32
    return %c0_i32, %c0_i32_0 : i32, i32
  }
  func.func @transform_11(%arg0: i32) -> (i32, i32) {
    %c0_i32 = arith.constant 0 : i32
    %c0_i32_0 = arith.constant 0 : i32
    %c0_i32_1 = arith.constant 0 : i32
    return %c0_i32, %c0_i32_0 : i32, i32
  }
  func.func @transform_12(%arg0: i32) -> (i32, i32) {
    %c0_i32 = arith.constant 0 : i32
    %c0_i32_0 = arith.constant 0 : i32
    %c0_i32_1 = arith.constant 0 : i32
    return %c0_i32, %c0_i32_0 : i32, i32
  }
  func.func @transform_13(%arg0: i32) -> (i32, i32) {
    %c0_i32 = arith.constant 0 : i32
    %c0_i32_0 = arith.constant 0 : i32
    %c0_i32_1 = arith.constant 0 : i32
    return %c0_i32, %c0_i32_0 : i32, i32
  }
  func.func @transform_14(%arg0: i32) -> (i32, i32) {
    %c0_i32 = arith.constant 0 : i32
    %c0_i32_0 = arith.constant 0 : i32
    %c0_i32_1 = arith.constant 0 : i32
    return %c0_i32, %c0_i32_0 : i32, i32
  }
  func.func @transform_15(%arg0: i32) -> (i32, i32) {
    %c0_i32 = arith.constant 0 : i32
    %c0_i32_0 = arith.constant 0 : i32
    %c0_i32_1 = arith.constant 0 : i32
    return %c0_i32, %c0_i32_0 : i32, i32
  }
  func.func @transform_16(%arg0: i32) -> (i32, i32) {
    %c0_i32 = arith.constant 0 : i32
    %c0_i32_0 = arith.constant 0 : i32
    %c0_i32_1 = arith.constant 0 : i32
    return %c0_i32, %c0_i32_0 : i32, i32
  }
  func.func @transform_17(%arg0: i32) -> (i32, i32) {
    %c0_i32 = arith.constant 0 : i32
    %c0_i32_0 = arith.constant 0 : i32
    return %c0_i32, %arg0 : i32, i32
  }
  func.func @transform_18(%arg0: i32) -> (i32, i32) {
    %c0_i32 = arith.constant 0 : i32
    %c0_i32_0 = arith.constant 0 : i32
    return %c0_i32, %arg0 : i32, i32
  }
  func.func @transform_19(%arg0: i32) -> (i32, i32) {
    %c0_i32 = arith.constant 0 : i32
    %c0_i32_0 = arith.constant 0 : i32
    return %c0_i32, %arg0 : i32, i32
  }
}

</mosaic_0001>

<llo_original>
// kernel: detector_forward.1
$region0: #{detector_forward.1}
  #allocation0 [shape = 'u32[]', space=smem, size = 0x4, offset = 0x4, fixed_abs, tag = 'smem constant byte address 0x4 - core index']
  #allocation1 [shape = 'u32[72,128]{1,0:T(1,128)}', space=vmem, size = 0x9000, scoped, tag = 'internal scratch']
  #allocation2 [shape = 'f32[1,1]{1,0:T(1,128)S(1)}', space=vmem, size = 0x200, scoped, tag = 'scoped memory for detector_forward.1']
  %s0 = inlined_call_operand.vmem [shape: f32[16,128], index: 0, kind: input, shape index: {}]
  %s1 = inlined_call_operand.vmem [shape: f32[20,16], index: 1, kind: input, shape index: {}]
  %s2 = inlined_call_operand.vmem [shape: f32[20,1], index: 2, kind: input, shape index: {}]
  %s3 = inlined_call_operand.vmem [shape: f32[10,20], index: 3, kind: input, shape index: {}]
  %s4 = inlined_call_operand.vmem [shape: f32[10,1], index: 4, kind: input, shape index: {}]
  %s5 = inlined_call_operand.vmem [shape: f32[10,1], index: 5, kind: input, shape index: {}]
  %s6 = inlined_call_operand.<no memory space> [shape: f32[1,1], index: 6, kind: input, shape index: {}]
  %s7 = inlined_call_operand.vmem [shape: f32[10,1], index: 7, kind: input, shape index: {}]
  %s8 = inlined_call_operand.vmem [shape: f32[10,1], index: 8, kind: input, shape index: {}]
  %s9 = inlined_call_operand.vmem [shape: f32[20,10], index: 9, kind: input, shape index: {}]
  %s10 = inlined_call_operand.vmem [shape: f32[20,1], index: 10, kind: input, shape index: {}]
  %s11 = inlined_call_operand.vmem [shape: f32[16,20], index: 11, kind: input, shape index: {}]
  %s12 = inlined_call_operand.vmem [shape: f32[16,1], index: 12, kind: input, shape index: {}]
  %s13 = inlined_call_operand.vmem [shape: f32[10,3], index: 13, kind: input, shape index: {}]
  %s14 = inlined_call_operand.vmem [shape: f32[10,1], index: 14, kind: input, shape index: {}]
  %s15 = inlined_call_operand.vmem [shape: f32[2,10], index: 15, kind: input, shape index: {}]
  %s16 = inlined_call_operand.vmem [shape: f32[2,1], index: 16, kind: input, shape index: {}]
  %s17 = inlined_call_operand.vmem [shape: f32[16,128], index: 17, kind: output, shape index: {0}]
  %s18 = inlined_call_operand.vmem [shape: f32[3,128], index: 18, kind: output, shape index: {1}]
  %s19 = inlined_call_operand.vmem [shape: f32[2,128], index: 19, kind: output, shape index: {2}]
  %20 = xla_tuple %s17, %s18, %s19
  %s21 = sld [smem:[#allocation0]]
  $region94: #{detector_forward.1} parent=0
    _
  %s23 = ssub.s32 1, %s21
  %s24 = scalar_select 0, %s23, %s21
  %v25 = vstv %s6
  %26 = vst [vmem:[#allocation2] sm:$0x1] %v25
  // Predicated region
  $region2: #{detector_forward.1} parent=0 // pred_check
    _
  $region3: #{detector_forward.1} parent=0 // pred_check_branch
    %28 = sbr.rel (0) target = $region5
  $region4: #{detector_forward.1} parent=0 // pred_region
    _
  $region5: #{detector_forward.1} parent=0 // pred_fallthru
    _
  // Predicated region
  $region6: #{detector_forward.1} parent=0 // pred_check
    _
  $region7: #{detector_forward.1} parent=0 // pred_check_branch
    %30 = sbr.rel (0) target = $region9
  $region8: #{detector_forward.1} parent=0 // pred_region
    _
  $region9: #{detector_forward.1} parent=0 // pred_fallthru
    _
  // Predicated region
  $region10: #{detector_forward.1} parent=0 // pred_check
    _
  $region11: #{detector_forward.1} parent=0 // pred_check_branch
    %32 = sbr.rel (0) target = $region13
  $region12: #{detector_forward.1} parent=0 // pred_region
    _
  $region13: #{detector_forward.1} parent=0 // pred_fallthru
    _
  // Predicated region
  $region14: #{detector_forward.1} parent=0 // pred_check
    _
  $region15: #{detector_forward.1} parent=0 // pred_check_branch
    %34 = sbr.rel (0) target = $region17
  $region16: #{detector_forward.1} parent=0 // pred_region
    _
  $region17: #{detector_forward.1} parent=0 // pred_fallthru
    _
  // Predicated region
  $region18: #{detector_forward.1} parent=0 // pred_check
    _
  $region19: #{detector_forward.1} parent=0 // pred_check_branch
    %36 = sbr.rel (0) target = $region21
  $region20: #{detector_forward.1} parent=0 // pred_region
    _
  $region21: #{detector_forward.1} parent=0 // pred_fallthru
    _
  // Predicated region
  $region22: #{detector_forward.1} parent=0 // pred_check
    _
  $region23: #{detector_forward.1} parent=0 // pred_check_branch
    %38 = sbr.rel (0) target = $region25
  $region24: #{detector_forward.1} parent=0 // pred_region
    _
  $region25: #{detector_forward.1} parent=0 // pred_fallthru
    _
  // Predicated region
  $region26: #{detector_forward.1} parent=0 // pred_check
    _
  $region27: #{detector_forward.1} parent=0 // pred_check_branch
    %40 = sbr.rel (0) target = $region29
  $region28: #{detector_forward.1} parent=0 // pred_region
    _
  $region29: #{detector_forward.1} parent=0 // pred_fallthru
    _
  // Predicated region
  $region30: #{detector_forward.1} parent=0 // pred_check
    _
  $region31: #{detector_forward.1} parent=0 // pred_check_branch
    %42 = sbr.rel (0) target = $region33
  $region32: #{detector_forward.1} parent=0 // pred_region
    _
  $region33: #{detector_forward.1} parent=0 // pred_fallthru
    _
  // Predicated region
  $region34: #{detector_forward.1} parent=0 // pred_check
    _
  $region35: #{detector_forward.1} parent=0 // pred_check_branch
    %44 = sbr.rel (0) target = $region37
  $region36: #{detector_forward.1} parent=0 // pred_region
    _
  $region37: #{detector_forward.1} parent=0 // pred_fallthru
    _
  // Predicated region
  $region38: #{detector_forward.1} parent=0 // pred_check
    _
  $region39: #{detector_forward.1} parent=0 // pred_check_branch
    %46 = sbr.rel (0) target = $region41
  $region40: #{detector_forward.1} parent=0 // pred_region
    _
  $region41: #{detector_forward.1} parent=0 // pred_fallthru
    _
  // Predicated region
  $region42: #{detector_forward.1} parent=0 // pred_check
    _
  $region43: #{detector_forward.1} parent=0 // pred_check_branch
    %48 = sbr.rel (0) target = $region45
  $region44: #{detector_forward.1} parent=0 // pred_region
    _
  $region45: #{detector_forward.1} parent=0 // pred_fallthru
    _
  // Predicated region
  $region46: #{detector_forward.1} parent=0 // pred_check
    _
  $region47: #{detector_forward.1} parent=0 // pred_check_branch
    %50 = sbr.rel (0) target = $region49
  $region48: #{detector_forward.1} parent=0 // pred_region
    _
  $region49: #{detector_forward.1} parent=0 // pred_fallthru
    _
  // Predicated region
  $region50: #{detector_forward.1} parent=0 // pred_check
    _
  $region51: #{detector_forward.1} parent=0 // pred_check_branch
    %52 = sbr.rel (0) target = $region53
  $region52: #{detector_forward.1} parent=0 // pred_region
    _
  $region53: #{detector_forward.1} parent=0 // pred_fallthru
    _
  // Predicated region
  $region54: #{detector_forward.1} parent=0 // pred_check
    _
  $region55: #{detector_forward.1} parent=0 // pred_check_branch
    %54 = sbr.rel (0) target = $region57
  $region56: #{detector_forward.1} parent=0 // pred_region
    _
  $region57: #{detector_forward.1} parent=0 // pred_fallthru
    _
  // Predicated region
  $region58: #{detector_forward.1} parent=0 // pred_check
    _
  $region59: #{detector_forward.1} parent=0 // pred_check_branch
    %56 = sbr.rel (0) target = $region61
  $region60: #{detector_forward.1} parent=0 // pred_region
    _
  $region61: #{detector_forward.1} parent=0 // pred_fallthru
    _
  // Predicated region
  $region62: #{detector_forward.1} parent=0 // pred_check
    _
  $region63: #{detector_forward.1} parent=0 // pred_check_branch
    %58 = sbr.rel (0) target = $region65
  $region64: #{detector_forward.1} parent=0 // pred_region
    _
  $region65: #{detector_forward.1} parent=0 // pred_fallthru
    _
  // Predicated region
  $region66: #{detector_forward.1} parent=0 // pred_check
    _
  $region67: #{detector_forward.1} parent=0 // pred_check_branch
    %60 = sbr.rel (0) target = $region69
  $region68: #{detector_forward.1} parent=0 // pred_region
    _
  $region69: #{detector_forward.1} parent=0 // pred_fallthru
    _
  %v61 = vld [vmem:[%s0] sm:$0xff]
  %v62 = vld [vmem:[%s0 + $0x8] sm:$0xff]
  %v63 = vld [vmem:[%s1] sm:$0xff]
  %v64 = vld [vmem:[%s1 + $0x8] sm:$0xff]
  %v65 = vld [vmem:[%s1 + $0x10] sm:$0xf]
  %v66 = vld [vmem:[%s2] sm:$0xff]
  %v67 = vld [vmem:[%s2 + $0x8] sm:$0xff]
  %v68 = vld [vmem:[%s2 + $0x10] sm:$0xf]
  %70 = vset.pattern.permute.xlu0 0
  %71 = vperm.xlu0 %70, %v66
  %v72 = vpop.permute.xlu0 %71
  %75 = vset.pattern.permute.xlu0 0
  %76 = vperm.xlu0 %75, %v67
  %v77 = vpop.permute.xlu0 %76
  %80 = vset.pattern.permute.xlu0 0
  %81 = vperm.xlu0 %80, %v68
  %v82 = vpop.permute.xlu0 %81
  %vm84 = vcmask 130048
  %v86 = vsel %vm84, %v63, 0
  %v89 = vsel %vm84, %v64, 0
  %v92 = vsel %vm84, %v65, 0
  %94 = vmatpush.msra.mxu0 0.0
  %95 = vmatpush.msra.mxu0 0.0
  %96 = vmatpush.msra.mxu0 0.0
  %97 = vmatpush.msra.mxu0 0.0
  %98 = vmatpush.msra.mxu0 0.0
  %99 = vmatpush.msra.mxu0 0.0
  %100 = vmatpush.msra.mxu0 0.0
  %101 = vmatpush.msra.mxu0 0.0
  %102 = vmatpush.msra.mxu0 0.0
  %103 = vmatpush.msra.mxu0 0.0
  %104 = vmatpush.msra.mxu0 0.0
  %105 = vmatpush.msra.mxu0 0.0
  %106 = vmatpush.msra.mxu0 0.0
  %107 = vmatpush.msra.mxu0 0.0
  %108 = vmatpush.msra.mxu0 %v62
  %109 = vmatpush.msra.mxu0 %v61
  %110 = vmatmul.f32.gmra.mxu0 %v86
  %v111 = vpop.f32.mrf.mxu0
  %v112 = vadd.f32 %v72, %v111
  %113 = vmatmul.f32.gmra.mxu0 %v89
  %v114 = vpop.f32.mrf.mxu0
  %v115 = vadd.f32 %v77, %v114
  %116 = vmatmul.f32.gmra.mxu0 %v92
  %v117 = vpop.f32.mrf.mxu0
  %v118 = vadd.f32 %v82, %v117
  %119 = vdwg.mxu0
  %v120 = vtanh.pop %v112
  %v121 = vtanh.pop %v115
  %v122 = vtanh.pop %v118
  %v123 = vld [vmem:[%s3] sm:$0xff]
  %v124 = vld [vmem:[%s3 + $0x8] sm:$0x3]
  %v125 = vld [vmem:[%s4] sm:$0xff]
  %v126 = vld [vmem:[%s4 + $0x8] sm:$0x3]
  %128 = vset.pattern.permute.xlu0 0
  %129 = vperm.xlu0 %128, %v125
  %v130 = vpop.permute.xlu0 %129
  %133 = vset.pattern.permute.xlu0 0
  %134 = vperm.xlu0 %133, %v126
  %v135 = vpop.permute.xlu0 %134
  %vm137 = vcmask 162816
  %v139 = vsel %vm137, %v123, 0
  %v142 = vsel %vm137, %v124, 0
  %vm144 = vcmask 1043456
  %v146 = vsel %vm144, %v122, 0
  %148 = vmatpush.msra.mxu0 0.0
  %149 = vmatpush.msra.mxu0 0.0
  %150 = vmatpush.msra.mxu0 0.0
  %151 = vmatpush.msra.mxu0 0.0
  %152 = vmatpush.msra.mxu0 0.0
  %153 = vmatpush.msra.mxu0 0.0
  %154 = vmatpush.msra.mxu0 0.0
  %155 = vmatpush.msra.mxu0 0.0
  %156 = vmatpush.msra.mxu0 0.0
  %157 = vmatpush.msra.mxu0 0.0
  %158 = vmatpush.msra.mxu0 0.0
  %159 = vmatpush.msra.mxu0 0.0
  %160 = vmatpush.msra.mxu0 0.0
  %161 = vmatpush.msra.mxu0 %v146
  %162 = vmatpush.msra.mxu0 %v121
  %163 = vmatpush.msra.mxu0 %v120
  %164 = vmatmul.f32.gmra.mxu0 %v139
  %v165 = vpop.f32.mrf.mxu0
  %v166 = vadd.f32 %v130, %v165
  %167 = vmatmul.f32.gmra.mxu0 %v142
  %v168 = vpop.f32.mrf.mxu0
  %v169 = vadd.f32 %v135, %v168
  %170 = vdwg.mxu0
  %v171 = vtanh.pop %v166
  %v172 = vtanh.pop %v169
  %v173 = vld [vmem:[%s5] sm:$0xff]
  %v174 = vld [vmem:[%s5 + $0x8] sm:$0x3]
  %176 = vset.pattern.permute.xlu0 0
  %177 = vperm.xlu0 %176, %v173
  %v178 = vpop.permute.xlu0 %177
  %181 = vset.pattern.permute.xlu0 0
  %182 = vperm.xlu0 %181, %v174
  %v183 = vpop.permute.xlu0 %182
  %v185 = vmul.f32 %v178, %v171
  %v186 = vmul.f32 %v183, %v172
  %vm187 = vcmask 1041408
  %v188 = vsel %vm187, %v186, 0.0
  %v189 = vadd.f32 %v185, %v188
  %v190 = vrot.slane %v189, 4
  %v191 = vadd.f32 %v189, %v190
  %v192 = vrot.slane %v191, 2
  %v193 = vadd.f32 %v191, %v192
  %v194 = vrot.slane %v193, 1
  %v195 = vadd.f32 %v193, %v194
  %v196 = vld [vmem:[#allocation2] sm:$0x1]
  %198 = vset.pattern.permute.xlu0 0
  %199 = vperm.xlu0 %198, %v196
  %v200 = vpop.permute.xlu0 %199
  %v202 = vperm.slane %v200, 0
  %v203 = vadd.f32 %v195, %v202
  %v204 = vld [vmem:[%s7] sm:$0xff]
  %v205 = vld [vmem:[%s7 + $0x8] sm:$0x3]
  %207 = vset.pattern.permute.xlu0 0
  %208 = vperm.xlu0 %207, %v204
  %v209 = vpop.permute.xlu0 %208
  %212 = vset.pattern.permute.xlu0 0
  %213 = vperm.xlu0 %212, %v205
  %v214 = vpop.permute.xlu0 %213
  %v216 = vmul.f32 %v209, %v203
  %v217 = vmul.f32 %v214, %v203
  %v218 = vld [vmem:[%s8] sm:$0xff]
  %v219 = vld [vmem:[%s8 + $0x8] sm:$0x3]
  %221 = vset.pattern.permute.xlu0 0
  %222 = vperm.xlu0 %221, %v218
  %v223 = vpop.permute.xlu0 %222
  %226 = vset.pattern.permute.xlu0 0
  %227 = vperm.xlu0 %226, %v219
  %v228 = vpop.permute.xlu0 %227
  %v230 = vadd.f32 %v216, %v223
  %v231 = vadd.f32 %v217, %v228
  %v232 = vtanh.pop %v230
  %v233 = vtanh.pop %v231
  %v234 = vld [vmem:[%s9] sm:$0xff]
  %v235 = vld [vmem:[%s9 + $0x8] sm:$0xff]
  %v236 = vld [vmem:[%s9 + $0x10] sm:$0xf]
  %v237 = vld [vmem:[%s10] sm:$0xff]
  %v238 = vld [vmem:[%s10 + $0x8] sm:$0xff]
  %v239 = vld [vmem:[%s10 + $0x10] sm:$0xf]
  %241 = vset.pattern.permute.xlu0 0
  %242 = vperm.xlu0 %241, %v237
  %v243 = vpop.permute.xlu0 %242
  %246 = vset.pattern.permute.xlu0 0
  %247 = vperm.xlu0 %246, %v238
  %v248 = vpop.permute.xlu0 %247
  %251 = vset.pattern.permute.xlu0 0
  %252 = vperm.xlu0 %251, %v239
  %v253 = vpop.permute.xlu0 %252
  %vm255 = vcmask 80896
  %v257 = vsel %vm255, %v234, 0
  %v260 = vsel %vm255, %v235, 0
  %v263 = vsel %vm255, %v236, 0
  %v266 = vsel %vm187, %v233, 0
  %268 = vmatpush.msra.mxu0 0.0
  %269 = vmatpush.msra.mxu0 0.0
  %270 = vmatpush.msra.mxu0 0.0
  %271 = vmatpush.msra.mxu0 0.0
  %272 = vmatpush.msra.mxu0 0.0
  %273 = vmatpush.msra.mxu0 0.0
  %274 = vmatpush.msra.mxu0 0.0
  %275 = vmatpush.msra.mxu0 0.0
  %276 = vmatpush.msra.mxu0 0.0
  %277 = vmatpush.msra.mxu0 0.0
  %278 = vmatpush.msra.mxu0 0.0
  %279 = vmatpush.msra.mxu0 0.0
  %280 = vmatpush.msra.mxu0 0.0
  %281 = vmatpush.msra.mxu0 0.0
  %282 = vmatpush.msra.mxu0 %v266
  %283 = vmatpush.msra.mxu0 %v232
  %284 = vmatmul.f32.gmra.mxu0 %v257
  %v285 = vpop.f32.mrf.mxu0
  %v286 = vadd.f32 %v243, %v285
  %287 = vmatmul.f32.gmra.mxu0 %v260
  %v288 = vpop.f32.mrf.mxu0
  %v289 = vadd.f32 %v248, %v288
  %290 = vmatmul.f32.gmra.mxu0 %v263
  %v291 = vpop.f32.mrf.mxu0
  %v292 = vadd.f32 %v253, %v291
  %293 = vdwg.mxu0
  %v294 = vtanh.pop %v286
  %v295 = vtanh.pop %v289
  %v296 = vtanh.pop %v292
  %v297 = vld [vmem:[%s11] sm:$0xff]
  %v298 = vld [vmem:[%s11 + $0x8] sm:$0xff]
  %v299 = vld [vmem:[%s12] sm:$0xff]
  %v300 = vld [vmem:[%s12 + $0x8] sm:$0xff]
  %302 = vset.pattern.permute.xlu0 0
  %303 = vperm.xlu0 %302, %v299
  %v304 = vpop.permute.xlu0 %303
  %307 = vset.pattern.permute.xlu0 0
  %308 = vperm.xlu0 %307, %v300
  %v309 = vpop.permute.xlu0 %308
  %v312 = vsel %vm137, %v297, 0
  %v315 = vsel %vm137, %v298, 0
  %v318 = vsel %vm144, %v296, 0
  %320 = vmatpush.msra.mxu0 0.0
  %321 = vmatpush.msra.mxu0 0.0
  %322 = vmatpush.msra.mxu0 0.0
  %323 = vmatpush.msra.mxu0 0.0
  %324 = vmatpush.msra.mxu0 0.0
  %325 = vmatpush.msra.mxu0 0.0
  %326 = vmatpush.msra.mxu0 0.0
  %327 = vmatpush.msra.mxu0 0.0
  %328 = vmatpush.msra.mxu0 0.0
  %329 = vmatpush.msra.mxu0 0.0
  %330 = vmatpush.msra.mxu0 0.0
  %331 = vmatpush.msra.mxu0 0.0
  %332 = vmatpush.msra.mxu0 0.0
  %333 = vmatpush.msra.mxu0 %v318
  %334 = vmatpush.msra.mxu0 %v295
  %335 = vmatpush.msra.mxu0 %v294
  %336 = vmatmul.f32.gmra.mxu0 %v312
  %v337 = vpop.f32.mrf.mxu0
  %v338 = vadd.f32 %v304, %v337
  %339 = vmatmul.f32.gmra.mxu0 %v315
  %v340 = vpop.f32.mrf.mxu0
  %v341 = vadd.f32 %v309, %v340
  %342 = vdwg.mxu0
  %343 = vst [vmem:[%s17] sm:$0xff] %v338
  %344 = vst [vmem:[%s17 + $0x8] sm:$0xff] %v341
  %v345 = vmul.f32 %v61, %v338
  %v346 = vmul.f32 %v62, %v341
  %v347 = vadd.f32 %v345, %v346
  %v348 = vrot.slane %v347, 4
  %v349 = vadd.f32 %v347, %v348
  %v350 = vrot.slane %v349, 2
  %v351 = vadd.f32 %v349, %v350
  %v352 = vrot.slane %v351, 1
  %v353 = vadd.f32 %v351, %v352
  %v354 = vmul.f32 %v61, %v61
  %v355 = vmul.f32 %v62, %v62
  %v356 = vadd.f32 %v354, %v355
  %v357 = vrot.slane %v356, 4
  %v358 = vadd.f32 %v356, %v357
  %v359 = vrot.slane %v358, 2
  %v360 = vadd.f32 %v358, %v359
  %v361 = vrot.slane %v360, 1
  %v362 = vadd.f32 %v360, %v361
  %v363 = vmul.f32 %v338, %v338
  %v364 = vmul.f32 %v341, %v341
  %v365 = vadd.f32 %v363, %v364
  %v366 = vrot.slane %v365, 4
  %v367 = vadd.f32 %v365, %v366
  %v368 = vrot.slane %v367, 2
  %v369 = vadd.f32 %v367, %v368
  %v370 = vrot.slane %v369, 1
  %v371 = vadd.f32 %v369, %v370
  %v372 = vrsqrt.pop %v362
  %v373 = vmul.f32 %v372, %v362
  %v374 = vmul.f32 %v373, %v372
  %v375 = vmul.f32 0.5, %v374
  %v376 = vsub.f32 1.5, %v375
  %v377 = vmul.f32 %v372, %v376
  %v378 = vmul.f32 %v362, %v377
  %vm379 = vcmp.eq.f32.partialorder %v362, inf
  %v380 = vsel %vm379, %v362, %v378
  %vm381 = vcmp.eq.f32.partialorder %v362, 0.0
  %v382 = vand.u32 %v362, 2147483648
  %v383 = vsel %vm381, %v382, %v380
  %v384 = vrsqrt.pop %v371
  %v385 = vmul.f32 %v384, %v371
  %v386 = vmul.f32 %v385, %v384
  %v387 = vmul.f32 0.5, %v386
  %v388 = vsub.f32 1.5, %v387
  %v389 = vmul.f32 %v384, %v388
  %v390 = vmul.f32 %v371, %v389
  %vm391 = vcmp.eq.f32.partialorder %v371, inf
  %v392 = vsel %vm391, %v371, %v390
  %vm393 = vcmp.eq.f32.partialorder %v371, 0.0
  %v394 = vand.u32 %v371, 2147483648
  %v395 = vsel %vm393, %v394, %v392
  %v396 = vsub.f32 %v61, %v338
  %v397 = vsub.f32 %v62, %v341
  %v398 = vmul.f32 %v396, %v396
  %v399 = vmul.f32 %v397, %v397
  %v400 = vadd.f32 %v398, %v399
  %v401 = vrot.slane %v400, 4
  %v402 = vadd.f32 %v400, %v401
  %v403 = vrot.slane %v402, 2
  %v404 = vadd.f32 %v402, %v403
  %v405 = vrot.slane %v404, 1
  %v406 = vadd.f32 %v404, %v405
  %v407 = vrsqrt.pop %v406
  %v408 = vmul.f32 %v407, %v406
  %v409 = vmul.f32 %v408, %v407
  %v410 = vmul.f32 0.5, %v409
  %v411 = vsub.f32 1.5, %v410
  %v412 = vmul.f32 %v407, %v411
  %v413 = vmul.f32 %v406, %v412
  %vm414 = vcmp.eq.f32.partialorder %v406, inf
  %v415 = vsel %vm414, %v406, %v413
  %vm416 = vcmp.eq.f32.partialorder %v406, 0.0
  %v417 = vand.u32 %v406, 2147483648
  %v418 = vsel %vm416, %v417, %v415
  %v419 = vrcp.pop %v383
  %v420 = vmul.f32 %v383, %v419
  %v421 = vsub.f32 1.0, %v420
  %v422 = vmul.f32 %v419, %v421
  %v423 = vadd.f32 %v419, %v422
  %vm424 = vweird.f32 %v383
  %vm425 = vweird.f32 %v419
  %vm426 = vmor %vm424, %vm425
  %v427 = vsel %vm426, %v419, %v423
  %v428 = vand.u32 2147483647, %v383
  %vm429 = vcmp.eq.f32.partialorder %v428, 8.507059e+37
  %v430 = vand.u32 %v383, 2147483648
  %v431 = vor.u32 1.1754944e-38, %v430
  %v432 = vsel %vm429, %v431, %v427
  %v433 = vmul.f32 %v418, %v432
  %v434 = vmax.f32 %v383, 1e-08
  %v435 = vmax.f32 %v395, 1e-08
  %v436 = vmul.f32 %v434, %v435
  %v437 = vrcp.pop %v436
  %v438 = vmul.f32 %v436, %v437
  %v439 = vsub.f32 1.0, %v438
  %v440 = vmul.f32 %v437, %v439
  %v441 = vadd.f32 %v437, %v440
  %vm442 = vweird.f32 %v436
  %vm443 = vweird.f32 %v437
  %vm444 = vmor %vm442, %vm443
  %v445 = vsel %vm444, %v437, %v441
  %v446 = vand.u32 2147483647, %v436
  %vm447 = vcmp.eq.f32.partialorder %v446, 8.507059e+37
  %v448 = vand.u32 %v436, 2147483648
  %v449 = vor.u32 1.1754944e-38, %v448
  %v450 = vsel %vm447, %v449, %v445
  %v451 = vmul.f32 %v353, %v450
  %v452 = vlaneseq
  %v453 = vshrl.u32 %v452, 7
  %vm454 = vcmp.eq.s32.totalorder %v453, 0
  %vm455 = vcmp.eq.s32.totalorder %v453, 1
  %v456 = vsel %vm455, %v433, %v451
  %v457 = vsel %vm454, %v203, %v456
  %458 = vst [vmem:[%s18] sm:$0x7] %v457
  %v459 = vld [vmem:[%s13] sm:$0xff]
  %v460 = vld [vmem:[%s13 + $0x8] sm:$0x3]
  %v461 = vld [vmem:[%s14] sm:$0xff]
  %v462 = vld [vmem:[%s14 + $0x8] sm:$0x3]
  %464 = vset.pattern.permute.xlu0 0
  %465 = vperm.xlu0 %464, %v461
  %v466 = vpop.permute.xlu0 %465
  %469 = vset.pattern.permute.xlu0 0
  %470 = vperm.xlu0 %469, %v462
  %v471 = vpop.permute.xlu0 %470
  %vm473 = vcmask 23552
  %v475 = vsel %vm473, %v459, 0
  %v478 = vsel %vm473, %v460, 0
  %vm480 = vcmask 1042432
  %v482 = vsel %vm480, %v457, 0
  %484 = vmatpush.msra.mxu0 0.0
  %485 = vmatpush.msra.mxu0 0.0
  %486 = vmatpush.msra.mxu0 0.0
  %487 = vmatpush.msra.mxu0 0.0
  %488 = vmatpush.msra.mxu0 0.0
  %489 = vmatpush.msra.mxu0 0.0
  %490 = vmatpush.msra.mxu0 0.0
  %491 = vmatpush.msra.mxu0 0.0
  %492 = vmatpush.msra.mxu0 0.0
  %493 = vmatpush.msra.mxu0 0.0
  %494 = vmatpush.msra.mxu0 0.0
  %495 = vmatpush.msra.mxu0 0.0
  %496 = vmatpush.msra.mxu0 0.0
  %497 = vmatpush.msra.mxu0 0.0
  %498 = vmatpush.msra.mxu0 0.0
  %499 = vmatpush.msra.mxu0 %v482
  %500 = vmatmul.f32.gmra.mxu0 %v475
  %v501 = vpop.f32.mrf.mxu0
  %v502 = vadd.f32 %v466, %v501
  %503 = vmatmul.f32.gmra.mxu0 %v478
  %v504 = vpop.f32.mrf.mxu0
  %v505 = vadd.f32 %v471, %v504
  %506 = vdwg.mxu0
  %v507 = vtanh.pop %v502
  %v508 = vtanh.pop %v505
  %v509 = vld [vmem:[%s15] sm:$0x3]
  %v510 = vld [vmem:[%s16] sm:$0x3]
  %512 = vset.pattern.permute.xlu0 0
  %513 = vperm.xlu0 %512, %v510
  %v514 = vpop.permute.xlu0 %513
  %v517 = vsel %vm255, %v509, 0
  %v520 = vsel %vm187, %v508, 0
  %522 = vmatpush.msra.mxu0 0.0
  %523 = vmatpush.msra.mxu0 0.0
  %524 = vmatpush.msra.mxu0 0.0
  %525 = vmatpush.msra.mxu0 0.0
  %526 = vmatpush.msra.mxu0 0.0
  %527 = vmatpush.msra.mxu0 0.0
  %528 = vmatpush.msra.mxu0 0.0
  %529 = vmatpush.msra.mxu0 0.0
  %530 = vmatpush.msra.mxu0 0.0
  %531 = vmatpush.msra.mxu0 0.0
  %532 = vmatpush.msra.mxu0 0.0
  %533 = vmatpush.msra.mxu0 0.0
  %534 = vmatpush.msra.mxu0 0.0
  %535 = vmatpush.msra.mxu0 0.0
  %536 = vmatpush.msra.mxu0 %v520
  %537 = vmatpush.msra.mxu0 %v507
  %538 = vmatmul.f32.gmra.mxu0 %v517
  %v539 = vpop.f32.mrf.mxu0
  %v540 = vadd.f32 %v514, %v539
  %541 = vdwg.mxu0
  %v542 = vsel %vm187, %v540, -inf
  %v543 = vrot.slane %v542, 4
  %v544 = vmax.f32 %v542, %v543
  %v545 = vrot.slane %v544, 2
  %v546 = vmax.f32 %v544, %v545
  %v547 = vrot.slane %v546, 1
  %v548 = vmax.f32 %v546, %v547
  %v549 = vsub.f32 %v540, %v548
  %v550 = vmul.f32 %v549, 1.442695
  %v551 = vpow.pop %v550
  %v552 = vsel %vm187, %v551, 0.0
  %v553 = vrot.slane %v552, 4
  %v554 = vadd.f32 %v552, %v553
  %v555 = vrot.slane %v554, 2
  %v556 = vadd.f32 %v554, %v555
  %v557 = vrot.slane %v556, 1
  %v558 = vadd.f32 %v556, %v557
  %v559 = vrcp.pop %v558
  %v560 = vmul.f32 %v558, %v559
  %v561 = vsub.f32 1.0, %v560
  %v562 = vmul.f32 %v559, %v561
  %v563 = vadd.f32 %v559, %v562
  %vm564 = vweird.f32 %v558
  %vm565 = vweird.f32 %v559
  %vm566 = vmor %vm564, %vm565
  %v567 = vsel %vm566, %v559, %v563
  %v568 = vand.u32 2147483647, %v558
  %vm569 = vcmp.eq.f32.partialorder %v568, 8.507059e+37
  %v570 = vand.u32 %v558, 2147483648
  %v571 = vor.u32 1.1754944e-38, %v570
  %v572 = vsel %vm569, %v571, %v567
  %v573 = vmul.f32 %v551, %v572
  %574 = vst [vmem:[%s19] sm:$0x3] %v573
  // Predicated region
  $region70: #{detector_forward.1} parent=0 // pred_check
    _
  $region71: #{detector_forward.1} parent=0 // pred_check_branch
    %576 = sbr.rel (0) target = $region73
  $region72: #{detector_forward.1} parent=0 // pred_region
    _
  $region73: #{detector_forward.1} parent=0 // pred_fallthru
    _
  // Predicated region
  $region74: #{detector_forward.1} parent=0 // pred_check
    _
  $region75: #{detector_forward.1} parent=0 // pred_check_branch
    %578 = sbr.rel (0) target = $region77
  $region76: #{detector_forward.1} parent=0 // pred_region
    _
  $region77: #{detector_forward.1} parent=0 // pred_fallthru
    _
  // Predicated region
  $region78: #{detector_forward.1} parent=0 // pred_check
    _
  $region79: #{detector_forward.1} parent=0 // pred_check_branch
    %580 = sbr.rel (0) target = $region81
  $region80: #{detector_forward.1} parent=0 // pred_region
    _
  $region81: #{detector_forward.1} parent=0 // pred_fallthru
    _
  // Predicated region
  $region82: #{detector_forward.1} parent=0 // pred_check
    _
  $region83: #{detector_forward.1} parent=0 // pred_check_branch
    %582 = sbr.rel (0) target = $region85
  $region84: #{detector_forward.1} parent=0 // pred_region
    _
  $region85: #{detector_forward.1} parent=0 // pred_fallthru
    _
  // Predicated region
  $region86: #{detector_forward.1} parent=0 // pred_check
    _
  $region87: #{detector_forward.1} parent=0 // pred_check_branch
    %584 = sbr.rel (0) target = $region89
  $region88: #{detector_forward.1} parent=0 // pred_region
    _
  $region89: #{detector_forward.1} parent=0 // pred_fallthru
    _
  // Predicated region
  $region90: #{detector_forward.1} parent=0 // pred_check
    _
  $region91: #{detector_forward.1} parent=0 // pred_check_branch
    %586 = sbr.rel (0) target = $region93
  $region92: #{detector_forward.1} parent=0 // pred_region
    _
  $region93: #{detector_forward.1} parent=0 // pred_fallthru
    _

</llo_original>
